<compile_context>
chip_gen: v5e
topology: v5e:2x2
jax: 0.10.0
libtpu: 0.0.40
codegen_flags: <defaults>
</compile_context>

<pallas_src>
import jax
import jax.numpy as jnp
from jax.experimental import pallas as pl
from jax.experimental.pallas import tpu as pltpu


_LANE = 128
_TARGET_BLOCK_BYTES = 8 * 1024 * 1024   # ~8 MiB per stream block


def _fbn_kernel(x_ref, scale_ref, shift_ref, o_ref):
    # x_ref: (tr, tl); scale/shift: (tr, 1) or (1, tl) f32 -> implicit broadcast.
    x = x_ref[...].astype(jnp.float32)
    o_ref[...] = (x * scale_ref[...] + shift_ref[...]).astype(o_ref.dtype)


def _choose_tiles(R, L, itemsize):
    """(8,128)-aligned block shape filling ~_TARGET_BLOCK_BYTES per stream.

    Blocks need not divide (R, L): the grid uses pl.cdiv and Pallas masks the
    partial last block. A block dim equal to the full extent is always legal.
    """
    sub_align = max(8, 32 // itemsize)           # f32: 8, bf16: 16, int8/fp8: 32
    budget_elems = max(_TARGET_BLOCK_BYTES // itemsize, sub_align * _LANE)

    # Lane tile: prefer the full row (contiguous HBM runs, unmasked vst).
    if L <= _LANE:
        tl = L                                            # full extent
    elif L * sub_align <= budget_elems:
        tl = L                                            # full row fits budget
    else:
        tl = (budget_elems // sub_align) // _LANE * _LANE
        tl = max(_LANE, min(tl, (L // _LANE) * _LANE))

    # Row tile: fill the remaining budget, aligned to the packed-sublane factor.
    tr = budget_elems // max(tl, 1)
    tr = max(sub_align, (tr // sub_align) * sub_align)
    if tr >= R:
        tr = R                                            # full extent

    # Megacore (v7x): keep >= 2 blocks along a parallel axis when possible.
    if pl.cdiv(R, tr) * pl.cdiv(L, tl) < 2:
        if R >= 2 * sub_align:
            tr = max(sub_align, (R // 2) // sub_align * sub_align)
        elif L >= 2 * _LANE:
            tl = max(_LANE, (L // 2) // _LANE * _LANE)

    return tr, tl


def frozen_batch_norm_2d(x, weight, bias, running_mean, running_var, eps=1e-5):
    """x: (N, C, H, W).  weight/bias/running_mean/running_var: (C,)."""
    N, C, H, W = x.shape
    HW = H * W
    itemsize = jnp.dtype(x.dtype).itemsize

    # Fold the frozen affine transform once, in float32, on the (C,) vectors.
    scale = weight.astype(jnp.float32) * jax.lax.rsqrt(
        running_var.astype(jnp.float32) + jnp.float32(eps))
    shift = bias.astype(jnp.float32) - running_mean.astype(jnp.float32) * scale

    if HW >= _LANE:
        # sublanes = N*C, lanes = H*W; per-row params broadcast over lanes.
        R, L = N * C, HW
        x2 = x.reshape(R, L)
        scale2 = jnp.tile(scale, N).reshape(R, 1)
        shift2 = jnp.tile(shift, N).reshape(R, 1)
        row_params = True
    else:
        # Small feature maps: sublanes = N, lanes = C*H*W (lane-dense stores);
        # per-lane params broadcast over rows.
        R, L = N, C * HW
        x2 = x.reshape(R, L)
        scale2 = jnp.repeat(scale, HW).reshape(1, L)
        shift2 = jnp.repeat(shift, HW).reshape(1, L)
        row_params = False

    tr, tl = _choose_tiles(R, L, itemsize)
    grid = (pl.cdiv(R, tr), pl.cdiv(L, tl))

    if row_params:
        pshape, pmap = (tr, 1), (lambda i, j: (i, 0))
    else:
        pshape, pmap = (1, tl), (lambda i, j: (0, j))

    cost = pl.CostEstimate(
        flops=2 * N * C * HW,
        transcendentals=0,
        bytes_accessed=2 * itemsize * N * C * HW,   # read x + write out
    )

    out = pl.pallas_call(
        _fbn_kernel,
        out_shape=jax.ShapeDtypeStruct((R, L), x.dtype),
        grid_spec=pltpu.PrefetchScalarGridSpec(
            num_scalar_prefetch=0,
            grid=grid,
            in_specs=[
                pl.BlockSpec((tr, tl), lambda i, j: (i, j)),
                pl.BlockSpec(pshape, pmap),
                pl.BlockSpec(pshape, pmap),
            ],
            out_specs=pl.BlockSpec((tr, tl), lambda i, j: (i, j)),
        ),
        compiler_params=pltpu.CompilerParams(
            dimension_semantics=("parallel", "parallel"),
            vmem_limit_bytes=48 * 1024 * 1024,
        ),
        cost_estimate=cost,
    )(x2, scale2, shift2)

    return out.reshape(N, C, H, W)


def _reference(x, weight, bias, running_mean, running_var, eps=1e-5):
    w = weight.reshape(1, -1, 1, 1)
    b = bias.reshape(1, -1, 1, 1)
    rv = running_var.reshape(1, -1, 1, 1)
    rm = running_mean.reshape(1, -1, 1, 1)
    scale = w * jax.lax.rsqrt(rv + eps)
    bias_ = b - rm * scale
    return x * scale + bias_


def _make_params(key, C):
    k_w, k_b, k_rm, k_rv = jax.random.split(key, 4)
    weight = jnp.ones((C,), jnp.float32) + 0.1 * jax.random.normal(k_w, (C,))
    bias = jnp.zeros((C,), jnp.float32) + 0.1 * jax.random.normal(k_b, (C,))
    running_mean = 0.5 * jax.random.normal(k_rm, (C,), dtype=jnp.float32)
    running_var = jnp.ones((C,), jnp.float32) + 0.2 * jnp.abs(
        jax.random.normal(k_rv, (C,), dtype=jnp.float32))
    return weight, bias, running_mean, running_var


if __name__ == "__main__":
    key = jax.random.PRNGKey(0)
    k1, k2, k3, k4 = jax.random.split(key, 4)

    # Case 1: HW >= 128 path (row-per-channel layout).
    N, C, H, W = 2, 4, 16, 16
    x = jax.random.normal(k1, (N, C, H, W), dtype=jnp.float32)
    weight, bias, running_mean, running_var = _make_params(k2, C)

    y = frozen_batch_norm_2d(x, weight, bias, running_mean, running_var)
    y = jax.block_until_ready(y)
    y_ref = _reference(x, weight, bias, running_mean, running_var)
    assert y.shape == (N, C, H, W)
    assert jnp.allclose(y, y_ref, atol=1e-5, rtol=1e-5)

    # Case 2: small-HW lane-dense path + masked partial lane block (7x7 maps).
    N2, C2, H2, W2 = 2, 8, 7, 7
    x_s = jax.random.normal(k3, (N2, C2, H2, W2), dtype=jnp.float32)
    weight2, bias2, running_mean2, running_var2 = _make_params(k4, C2)

    y_s = frozen_batch_norm_2d(x_s, weight2, bias2, running_mean2, running_var2)
    y_s = jax.block_until_ready(y_s)
    y_s_ref = _reference(x_s, weight2, bias2, running_mean2, running_var2)
    assert y_s.shape == (N2, C2, H2, W2)
    assert jnp.allclose(y_s, y_s_ref, atol=1e-5, rtol=1e-5)

    print("KERNEL_OK")
</pallas_src>

<mosaic_0001>
module attributes {stable_mosaic.version = 11 : i64} {
  func.func @_fbn_kernel(%arg0: i32, %arg1: i32, %arg2: memref<8x128xf32, #tpu.memory_space<vmem>>, %arg3: memref<8x1xf32, #tpu.memory_space<vmem>>, %arg4: memref<8x1xf32, #tpu.memory_space<vmem>>, %arg5: memref<8x128xf32, #tpu.memory_space<vmem>>) attributes {dimension_semantics = [#tpu.dimension_semantics<parallel>, #tpu.dimension_semantics<parallel>], iteration_bounds = array<i64: 1, 2>, scalar_prefetch = 0 : i64, scratch_operands = 0 : i64, tpu.core_type = #tpu.core_type<tc>, window_params = [{transform_indices = @transform_0, window_bounds = array<i64: 8, 128>}, {transform_indices = @transform_1, window_bounds = array<i64: 8, 1>}, {transform_indices = @transform_2, window_bounds = array<i64: 8, 1>}, {transform_indices = @transform_3, window_bounds = array<i64: 8, 128>}]} {
    %c0 = arith.constant 0 : index
    %c0_0 = arith.constant 0 : index
    %0 = vector.load %arg2[%c0, %c0_0] : memref<8x128xf32, #tpu.memory_space<vmem>>, vector<8x128xf32>
    %c0_1 = arith.constant 0 : index
    %c0_2 = arith.constant 0 : index
    %1 = vector.load %arg3[%c0_1, %c0_2] : memref<8x1xf32, #tpu.memory_space<vmem>>, vector<8x1xf32>
    %2 = vector.broadcast %1 : vector<8x1xf32> to vector<8x128xf32>
    %3 = arith.mulf %0, %2 : vector<8x128xf32>
    %c0_3 = arith.constant 0 : index
    %c0_4 = arith.constant 0 : index
    %4 = vector.load %arg4[%c0_3, %c0_4] : memref<8x1xf32, #tpu.memory_space<vmem>>, vector<8x1xf32>
    %5 = vector.broadcast %4 : vector<8x1xf32> to vector<8x128xf32>
    %6 = arith.addf %3, %5 : vector<8x128xf32>
    %c0_5 = arith.constant 0 : index
    %c0_6 = arith.constant 0 : index
    %7 = vector.load %arg5[%c0_5, %c0_6] : memref<8x128xf32, #tpu.memory_space<vmem>>, vector<8x128xf32>
    tpu.vector_store %arg5[%c0_5, %c0_6], %6 {strides = array<i32>} : memref<8x128xf32, #tpu.memory_space<vmem>>, vector<8x128xf32>,
    return
  }
  func.func @transform_0(%arg0: i32, %arg1: i32) -> (i32, i32) {
    %c0_i32 = arith.constant 0 : i32
    return %arg0, %arg1 : i32, i32
  }
  func.func @transform_1(%arg0: i32, %arg1: i32) -> (i32, i32) {
    %c0_i32 = arith.constant 0 : i32
    %c0_i32_0 = arith.constant 0 : i32
    return %arg0, %c0_i32 : i32, i32
  }
  func.func @transform_2(%arg0: i32, %arg1: i32) -> (i32, i32) {
    %c0_i32 = arith.constant 0 : i32
    %c0_i32_0 = arith.constant 0 : i32
    return %arg0, %c0_i32 : i32, i32
  }
  func.func @transform_3(%arg0: i32, %arg1: i32) -> (i32, i32) {
    %c0_i32 = arith.constant 0 : i32
    return %arg0, %arg1 : i32, i32
  }
}

</mosaic_0001>

<llo_original>
// kernel: tpu_custom_call.1
$region0: #{tpu_custom_call.1}
  #allocation0 [shape = 'u32[]', space=smem, size = 0x4, offset = 0x4, fixed_abs, tag = 'smem constant byte address 0x4 - core index']
  #allocation1 [shape = 'u32[72,128]{1,0:T(1,128)}', space=vmem, size = 0x9000, scoped, tag = 'internal scratch']
  %s0 = inlined_call_operand.vmem [shape: f32[8,256], index: 0, kind: input, shape index: {}]
  %s1 = inlined_call_operand.vmem [shape: f32[8,1], index: 1, kind: input, shape index: {}]
  %s2 = inlined_call_operand.vmem [shape: f32[8,1], index: 2, kind: input, shape index: {}]
  %s3 = inlined_call_operand.hbm [shape: f32[8,256], index: 3, kind: output, shape index: {}]
  %s4 = sld [smem:[#allocation0]]
  $region45: #{tpu_custom_call.1} parent=0
    _
  %s6 = ssub.s32 1, %s4
  %s7 = scalar_select 0, %s6, %s4
  $region1: #{tpu_custom_call.1} parent=0
    #allocation2 [shape = 'u8[8192]{0}', space=vmem, size = 0x2000, scoped, tag = 'output window, operand 0']
    #allocation3 [shape = 's32[2]{0}', space=sflag, size = 0x8, scoped, tag = 'scoped memory for tpu_custom_call.1']
    %8 = vsyncpa [#allocation3], 0
    %s9 = scalar_lea.sflag [#allocation3], 1
    %10 = vsyncpa %s9, 0
    loop: start=0, step=1, limit=4
    $region2: #{tpu_custom_call.1} parent=1 // loop_pre_header
      _
    $region3: #{tpu_custom_call.1} parent=1 // loop_header
      %s12 = sphi 0, %s16
      %p13 = scmp.ge.s32.totalorder %s12, 4
      %s19 = sphi 0, %s31
      %s20 = sphi 0, %s27
      %s21 = sphi 0, %s19
      %s22 = sphi 0, %s20
      %s23 = sphi 0, %s21
      %s24 = sphi 0, %s22
      %s36 = sphi 0, %s38
      %s39 = sphi 0, %s36
      %s40 = sphi 0, %s39
      %s56 = sphi 0, %s40
      %s62 = sphi 0, %s64
      %s65 = sphi 0, %s62
      %s66 = sphi 0, %s65
      %s82 = sphi 0, %s66
      %s88 = sphi 0, %s90
      %s91 = sphi 0, %s88
      %s92 = sphi 0, %s91
      %s108 = sphi 0, %s92
      %s116 = sphi 0, %s118
      %s119 = sphi 0, %s116
      %s120 = sphi 0, %s119
      %s136 = sphi 0, %s120
    $region4: #{tpu_custom_call.1} parent=1 // loop_header_branch
      %15 = sbr.rel (%p13) target = $region8
    $region5: #{tpu_custom_call.1} parent=1 // loop_body
      %s17 = ssub.s32 %s12, 1
      %s18 = ssub.s32 %s12, 2
      %s25 = sadd.s32 1, %s20
      %p26 = scmp.ge.s32.totalorder %s25, 2
      %s27 = scalar_select %p26, 0, %s25
      %s28 = sadd.s32 1, %s19
      %s29 = scalar_select %p26, %s28, %s19
      %p30 = scmp.ge.s32.totalorder %s29, 1
      %s31 = scalar_select %p30, 0, %s29
      %s32 = ssub.s32 %s19, %s31
      %s33 = ssub.s32 %s20, %s27
      %s34 = sor.u32 %s32, %s33
      %p35 = scmp.eq.s32.totalorder %s34, 0
      %s37 = sadd.s32 %s36, 1
      %s38 = scalar_select %p35, %s36, %s37
      %p41 = pneg %p35
      %p42 = scmp.eq.s32.totalorder %s12, 1
      %p43 = por %p41, %p42
      %p44 = scmp.ne.s32.totalorder %s36, %s39
      %p45 = scmp.eq.s32.totalorder %s12, 0
      %p46 = por %p44, %p45
      %p47 = scmp.ne.s32.totalorder %s36, %s39
      %p48 = scmp.eq.s32.totalorder %s17, 1
      %p49 = por %p47, %p48
      %p50 = scmp.ne.s32.totalorder %s39, %s40
      %p51 = scmp.eq.s32.totalorder %s17, 0
      %p52 = por %p50, %p51
      %p53 = scmp.ne.s32.totalorder %s39, %s40
      %p54 = scmp.eq.s32.totalorder %s18, 1
      %p55 = por %p53, %p54
      %p57 = scmp.ne.s32.totalorder %s40, %s56
      %p58 = scmp.eq.s32.totalorder %s18, 0
      %p59 = por %p57, %p58
      %s60 = ssub.s32 %s19, %s31
      %p61 = scmp.eq.s32.totalorder %s60, 0
      %s63 = sadd.s32 %s62, 1
      %s64 = scalar_select %p61, %s62, %s63
      %p67 = pneg %p61
      %p68 = scmp.eq.s32.totalorder %s12, 1
      %p69 = por %p67, %p68
      %p70 = scmp.ne.s32.totalorder %s62, %s65
      %p71 = scmp.eq.s32.totalorder %s12, 0
      %p72 = por %p70, %p71
      %p73 = scmp.ne.s32.totalorder %s62, %s65
      %p74 = scmp.eq.s32.totalorder %s17, 1
      %p75 = por %p73, %p74
      %p76 = scmp.ne.s32.totalorder %s65, %s66
      %p77 = scmp.eq.s32.totalorder %s17, 0
      %p78 = por %p76, %p77
      %p79 = scmp.ne.s32.totalorder %s65, %s66
      %p80 = scmp.eq.s32.totalorder %s18, 1
      %p81 = por %p79, %p80
      %p83 = scmp.ne.s32.totalorder %s66, %s82
      %p84 = scmp.eq.s32.totalorder %s18, 0
      %p85 = por %p83, %p84
      %s86 = ssub.s32 %s19, %s31
      %p87 = scmp.eq.s32.totalorder %s86, 0
      %s89 = sadd.s32 %s88, 1
      %s90 = scalar_select %p87, %s88, %s89
      %p93 = pneg %p87
      %p94 = scmp.eq.s32.totalorder %s12, 1
      %p95 = por %p93, %p94
      %p96 = scmp.ne.s32.totalorder %s88, %s91
      %p97 = scmp.eq.s32.totalorder %s12, 0
      %p98 = por %p96, %p97
      %p99 = scmp.ne.s32.totalorder %s88, %s91
      %p100 = scmp.eq.s32.totalorder %s17, 1
      %p101 = por %p99, %p100
      %p102 = scmp.ne.s32.totalorder %s91, %s92
      %p103 = scmp.eq.s32.totalorder %s17, 0
      %p104 = por %p102, %p103
      %p105 = scmp.ne.s32.totalorder %s91, %s92
      %p106 = scmp.eq.s32.totalorder %s18, 1
      %p107 = por %p105, %p106
      %p109 = scmp.ne.s32.totalorder %s92, %s108
      %p110 = scmp.eq.s32.totalorder %s18, 0
      %p111 = por %p109, %p110
      %s112 = ssub.s32 %s19, %s31
      %s113 = ssub.s32 %s20, %s27
      %s114 = sor.u32 %s112, %s113
      %p115 = scmp.eq.s32.totalorder %s114, 0
      %s117 = sadd.s32 %s116, 1
      %s118 = scalar_select %p115, %s116, %s117
      %p121 = pneg %p115
      %p122 = scmp.eq.s32.totalorder %s12, 1
      %p123 = por %p121, %p122
      %p124 = scmp.ne.s32.totalorder %s116, %s119
      %p125 = scmp.eq.s32.totalorder %s12, 0
      %p126 = por %p124, %p125
      %p127 = scmp.ne.s32.totalorder %s116, %s119
      %p128 = scmp.eq.s32.totalorder %s17, 1
      %p129 = por %p127, %p128
      %p130 = scmp.ne.s32.totalorder %s119, %s120
      %p131 = scmp.eq.s32.totalorder %s17, 0
      %p132 = por %p130, %p131
      %p133 = scmp.ne.s32.totalorder %s119, %s120
      %p134 = scmp.eq.s32.totalorder %s18, 1
      %p135 = por %p133, %p134
      %p137 = scmp.ne.s32.totalorder %s120, %s136
      %p138 = scmp.eq.s32.totalorder %s18, 0
      %p139 = por %p137, %p138
      %p140 = scmp.le.s32.totalorder 1, %s12
      %p141 = scmp.lt.s32.totalorder %s12, 3
      %p142 = pnand %p140, %p141
      %p143 = pneg %p142
      // Predicated region
      $region9: #{tpu_custom_call.1} parent=5 // pred_check
        _
      $region10: #{tpu_custom_call.1} parent=5 // pred_check_branch
        %145 = sbr.rel (%p142) target = $region12
      $region11: #{tpu_custom_call.1} parent=5 // pred_region
        %s146 = ssub.s32 %s12, 1
        // Predicated region
        $region13: #{tpu_custom_call.1} parent=11 // pred_check
          %p147 = pneg %p78
        $region14: #{tpu_custom_call.1} parent=11 // pred_check_branch
          %149 = sbr.rel (%p147) target = $region16
        $region15: #{tpu_custom_call.1} parent=11 // pred_region
          %p150 = scmp.lt.s32.totalorder %s21, 0
          %s151 = scalar_select %p150, %s21, 0
          %s152 = smul.addr %s151, 8
          %s153 = scalar_lea.vmem %s1, %s152
        $region16: #{tpu_custom_call.1} parent=11 // pred_fallthru
          _
        // Predicated region
        $region17: #{tpu_custom_call.1} parent=11 // pred_check
          %p154 = pneg %p104
        $region18: #{tpu_custom_call.1} parent=11 // pred_check_branch
          %156 = sbr.rel (%p154) target = $region20
        $region19: #{tpu_custom_call.1} parent=11 // pred_region
          %p157 = scmp.lt.s32.totalorder %s21, 0
          %s158 = scalar_select %p157, %s21, 0
          %s159 = smul.addr %s158, 8
          %s160 = scalar_lea.vmem %s2, %s159
        $region20: #{tpu_custom_call.1} parent=11 // pred_fallthru
          _
      $region12: #{tpu_custom_call.1} parent=5 // pred_fallthru
        _
      %p161 = scmp.lt.s32.totalorder %s12, 2
      // Predicated region
      $region21: #{tpu_custom_call.1} parent=5 // pred_check
        %p162 = pneg %p161
      $region22: #{tpu_custom_call.1} parent=5 // pred_check_branch
        %164 = sbr.rel (%p162) target = $region24
      $region23: #{tpu_custom_call.1} parent=5 // pred_region
        // Predicated region
        $region25: #{tpu_custom_call.1} parent=23 // pred_check
          %p165 = pneg %p46
        $region26: #{tpu_custom_call.1} parent=23 // pred_check_branch
          %167 = sbr.rel (%p165) target = $region28
        $region27: #{tpu_custom_call.1} parent=23 // pred_region
          %p168 = scmp.lt.s32.totalorder %s19, 0
          %s169 = scalar_select %p168, %s19, 0
          %p170 = scmp.lt.s32.totalorder %s20, 1
          %s171 = scalar_select %p170, %s20, 1
          %s172 = smul.addr %s169, 2
          %s173 = sadd.s32 %s171, %s172
          %s174 = smul.addr %s173, 8
          %s175 = scalar_lea.vmem %s0, %s174
        $region28: #{tpu_custom_call.1} parent=23 // pred_fallthru
          _
      $region24: #{tpu_custom_call.1} parent=5 // pred_fallthru
        _
      %p176 = scmp.le.s32.totalorder 1, %s12
      %p177 = scmp.lt.s32.totalorder %s12, 3
      %p178 = pnand %p176, %p177
      %p179 = pneg %p178
      // Predicated region
      $region29: #{tpu_custom_call.1} parent=5 // pred_check
        _
      $region30: #{tpu_custom_call.1} parent=5 // pred_check_branch
        %181 = sbr.rel (%p178) target = $region32
      $region31: #{tpu_custom_call.1} parent=5 // pred_region
        %s182 = ssub.s32 %s12, 1
        %p183 = scmp.lt.s32.totalorder %s21, 0
        %s184 = scalar_select %p183, %s21, 0
        %p185 = scmp.lt.s32.totalorder %s22, 1
        %s186 = scalar_select %p185, %s22, 1
        %s187 = smul.addr %s184, 2
        %s188 = sadd.s32 %s186, %s187
        %s189 = smul.addr %s188, 8
        %s190 = scalar_lea.vmem %s0, %s189
        %p191 = pneg %p52
        %p192 = pneg %p49
        %p193 = scmp.lt.s32.totalorder %s21, 0
        %s194 = scalar_select %p193, %s21, 0
        %s195 = smul.addr %s194, 8
        %s196 = scalar_lea.vmem %s1, %s195
        %p197 = pneg %p78
        %p198 = pneg %p75
        %p199 = scmp.lt.s32.totalorder %s21, 0
        %s200 = scalar_select %p199, %s21, 0
        %s201 = smul.addr %s200, 8
        %s202 = scalar_lea.vmem %s2, %s201
        %p203 = pneg %p104
        %p204 = pneg %p101
        %p205 = pneg %p132
        %p206 = pneg %p129
        %s207 = sand.u32 %s119, 1
        %s208 = scalar_lea.sflag [#allocation3], %s207
        %s209 = sand.u32 %s119, 1
        %s210 = smul.addr %s209, 8
        %s211 = scalar_lea.vmem [#allocation2], %s210
        %p212 = scmp.lt.s32.totalorder %s21, 0
        %s213 = scalar_select %p212, %s21, 0
        %p214 = scmp.lt.s32.totalorder %s22, 1
        %s215 = scalar_select %p214, %s22, 1
        %s216 = smul.addr %s213, 2
        %s217 = sadd.s32 %s215, %s216
        %s218 = smul.addr %s217, 8
        %s219 = scalar_lea.vmem %s0, %s218
        %p220 = scmp.lt.s32.totalorder %s21, 0
        %s221 = scalar_select %p220, %s21, 0
        %s222 = smul.addr %s221, 8
        %s223 = scalar_lea.vmem %s1, %s222
        %p224 = scmp.lt.s32.totalorder %s21, 0
        %s225 = scalar_select %p224, %s21, 0
        %s226 = smul.addr %s225, 8
        %s227 = scalar_lea.vmem %s2, %s226
        %v228 = vld [vmem:[%s219] sm:$0xff]
        %v229 = vld [vmem:[%s223] sm:$0xff]
        %231 = vset.pattern.permute.xlu0 0
        %232 = vperm.xlu0 %231, %v229
        %v233 = vpop.permute.xlu0 %232
        %v235 = vmul.f32 %v228, %v233
        %v236 = vld [vmem:[%s227] sm:$0xff]
        %238 = vset.pattern.permute.xlu0 0
        %239 = vperm.xlu0 %238, %v236
        %v240 = vpop.permute.xlu0 %239
        %v242 = vadd.f32 %v235, %v240
        %243 = vst [vmem:[%s211] sm:$0xff] %v242
        %s244 = sand.u32 %s119, 1
        %s245 = scalar_lea.sflag [#allocation3], %s244
        %s246 = sand.u32 %s119, 1
        %s247 = smul.addr %s246, 8
        %s248 = scalar_lea.vmem [#allocation2], %s247
        // Predicated region
        $region33: #{tpu_custom_call.1} parent=31 // pred_check
          %p249 = pneg %p129
        $region34: #{tpu_custom_call.1} parent=31 // pred_check_branch
          %251 = sbr.rel (%p249) target = $region36
        $region35: #{tpu_custom_call.1} parent=31 // pred_region
          %253 = vsyncadd %s245, 0
          %s254 = smul.addr %s21, 2
          %s255 = sadd.s32 %s22, %s254
          %s256 = smul.addr %s255, 8
          %s257 = scalar_lea.hbm %s3, %s256
          %s259 = sshll.u32 %s248, 4
          %s260 = int_to_ptr.vmem [resolvable:$true] %s259
          %s261 = sshll.u32 %s257, 4
          %s262 = int_to_ptr.hbm [resolvable:$true] %s261
          %264 = dma.vmem_to_hbm [thread:$0]  %s260, 128, %s262, %s245
        $region36: #{tpu_custom_call.1} parent=31 // pred_fallthru
          _
      $region32: #{tpu_custom_call.1} parent=5 // pred_fallthru
        _
      %p265 = scmp.le.s32.totalorder 2, %s12
      // Predicated region
      $region37: #{tpu_custom_call.1} parent=5 // pred_check
        %p266 = pneg %p265
      $region38: #{tpu_custom_call.1} parent=5 // pred_check_branch
        %268 = sbr.rel (%p266) target = $region40
      $region39: #{tpu_custom_call.1} parent=5 // pred_region
        %s269 = ssub.s32 %s12, 2
        // Predicated region
        $region41: #{tpu_custom_call.1} parent=39 // pred_check
          %p270 = pneg %p135
        $region42: #{tpu_custom_call.1} parent=39 // pred_check_branch
          %272 = sbr.rel (%p270) target = $region44
        $region43: #{tpu_custom_call.1} parent=39 // pred_region
          %s273 = sand.u32 %s120, 1
          %s274 = scalar_lea.sflag [#allocation3], %s273
          %s275 = sand.u32 %s120, 1
          %s276 = smul.addr %s275, 8
          %s277 = scalar_lea.vmem [#allocation2], %s276
          %279 = dma.done %s274, 128
        $region44: #{tpu_custom_call.1} parent=39 // pred_fallthru
          _
      $region40: #{tpu_custom_call.1} parent=5 // pred_fallthru
        _
    $region6: #{tpu_custom_call.1} parent=1 // loop_footer
      %s16 = sadd.s32 1, %s12
    $region7: #{tpu_custom_call.1} parent=1 // loop_footer_branch
      %11 = sbr.rel target = $region3
    $region8: #{tpu_custom_call.1} parent=1 // loop_exit
      _
    %280 = vsyncpa [#allocation3], 1
    %s281 = scalar_lea.sflag [#allocation3], 1
    %282 = vsyncpa %s281, 1

</llo_original>
